<compile_context>
chip_gen: v6e
topology: v6e:2x2x1
jax: 0.10.0
libtpu: 0.0.40
codegen_flags: <defaults>
</compile_context>

<pallas_src>
import jax
import jax.numpy as jnp
from jax.experimental import pallas as pl
from jax.experimental.pallas import tpu as pltpu

BN_EPS = 1e-3


def _vfe_kernel(x_ref, w_ref, b_ref, out_ref):
    # x_ref  : (bn, T*Cin)  flat lane-dense input block (any float dtype)
    # w_ref  : (Cin, U)     BN-folded linear weight (f32)
    # b_ref  : (1, U)       BN-folded bias (f32)
    # out_ref: (bn, T*2U)   flat lane-dense output block
    cin, u = w_ref.shape
    t_count = x_ref.shape[1] // cin
    width = 2 * u
    w = w_ref[...]
    b = b_ref[...]

    agg = None
    for t in range(t_count):  # static unroll; T (points per voxel) is small here
        x_t = x_ref[:, t * cin:(t + 1) * cin].astype(jnp.float32)        # (bn, Cin)
        # K=Cin contraction on the MXU (f32 accumulate); kernel is HBM-bound, so the
        # MXU-vs-VPU choice is immaterial unless profiling says otherwise.
        y_t = jnp.dot(x_t, w, preferred_element_type=jnp.float32) + b    # (bn, U)
        pw_t = jnp.maximum(y_t, 0.0)                                     # ReLU
        out_ref[:, t * width:t * width + u] = pw_t.astype(out_ref.dtype)
        agg = pw_t if agg is None else jnp.maximum(agg, pw_t)            # max over T

    agg = agg.astype(out_ref.dtype)
    for t in range(t_count):
        out_ref[:, t * width + u:(t + 1) * width] = agg


def _round_up(x, m):
    return -(-x // m) * m


def _device_vmem_plan():
    """(tile_budget_bytes, vmem_cap_bytes, two_tensorcores) per TPU generation."""
    kind = ""
    try:
        kind = jax.devices()[0].device_kind.lower()
    except Exception:
        pass
    if "v7" in kind:                          # 64 MiB physical VMEM per TC, 2 TCs/chip
        return 24 << 20, 56 << 20, True
    if "v6" in kind:                          # 128 MiB physical VMEM, 1 TC
        return 64 << 20, 110 << 20, False
    if "v5 lite" in kind or "v5e" in kind or "v5lite" in kind:
        return 10 << 20, 96 << 20, False      # stay well under the 16 MiB scoped default
    return 10 << 20, 64 << 20, False          # unknown: conservative


def vfe_layer(inputs, weight, gamma, beta, running_mean, running_var,
              *, block_n=None, out_dtype=None, vmem_limit_bytes=None):
    """inputs: (N, T, Cin); weight: (Cin, U) (== torch Linear.weight.T).
    Returns (N, T, 2U) matching the PyTorch VFELayer forward (eval-mode BN)."""
    N, T, Cin = inputs.shape
    U = weight.shape[1]
    out_dtype = inputs.dtype if out_dtype is None else jnp.dtype(out_dtype)

    # ---- Fold BatchNorm (eval mode) into the linear weight / bias ----------------
    scale = gamma * jax.lax.rsqrt(running_var + BN_EPS)              # (U,)
    w_folded = (weight * scale[None, :]).astype(jnp.float32)         # (Cin, U)
    b_folded = (beta - running_mean * scale).reshape(1, U).astype(jnp.float32)

    # ---- Lane-dense 2-D slab view of the input (row-major contiguous) ------------
    x_flat = inputs.reshape(N, T * Cin)

    # ---- Tile sizing with padded (8,128) accounting ------------------------------
    budget, vmem_cap, two_cores = _device_vmem_plan()
    in_row = _round_up(T * Cin, 128) * 4                             # f32 input row
    out_row = _round_up(T * 2 * U, 128) * jnp.dtype(out_dtype).itemsize
    inter_row = 6 * 128 * 4                                          # live f32 values (x_t, y_t, pw_t, agg)
    per_row = 2 * in_row + 2 * out_row + inter_row                   # double-buffered tiles + intermediates

    if block_n is None:
        block_n = max(8, min(4096, budget // per_row))
        if two_cores and N >= 16:
            # keep >= 2 grid steps so both v7x TensorCores get work
            block_n = min(block_n, _round_up(pl.cdiv(N, 2), 8))
    if block_n >= N:
        block_n = N                                   # block == full dim is always legal
    else:
        block_n = max(8, (block_n // 8) * 8)          # sublane-aligned tiles

    grid_n = pl.cdiv(N, block_n)                      # last block clamped/masked by Pallas

    if vmem_limit_bytes is None:
        tile_bytes = per_row * block_n
        vmem_limit_bytes = int(min(vmem_cap, max(16 << 20, tile_bytes + (8 << 20))))

    out_flat = pl.pallas_call(
        _vfe_kernel,
        out_shape=jax.ShapeDtypeStruct((N, T * 2 * U), out_dtype),
        grid=(grid_n,),
        in_specs=[
            pl.BlockSpec((block_n, T * Cin), lambda i: (i, 0)),
            pl.BlockSpec((Cin, U), lambda i: (0, 0)),
            pl.BlockSpec((1, U), lambda i: (0, 0)),
        ],
        out_specs=pl.BlockSpec((block_n, T * 2 * U), lambda i: (i, 0)),
        compiler_params=pltpu.CompilerParams(
            dimension_semantics=("parallel",),
            vmem_limit_bytes=vmem_limit_bytes,
        ),
    )(x_flat, w_folded, b_folded)

    return out_flat.reshape(N, T, 2 * U)


def vfe_layer_ref(inputs, weight, gamma, beta, running_mean, running_var):
    """Pure-JAX reference mirroring the PyTorch forward (eval-mode BN)."""
    x = jnp.einsum("ntc,cu->ntu", inputs, weight)
    x = (x - running_mean) * jax.lax.rsqrt(running_var + BN_EPS) * gamma + beta
    pw = jnp.maximum(x, 0.0)
    agg = jnp.max(pw, axis=1, keepdims=True)
    rep = jnp.broadcast_to(agg, pw.shape)
    return jnp.concatenate([pw, rep], axis=2)


if __name__ == "__main__":
    key = jax.random.PRNGKey(0)

    # Small shapes consistent with the module: N voxels, T points/voxel, Cin features.
    N, T, Cin = 8, 8, 4
    out_channels = 32
    U = out_channels // 2  # self.units

    k_in, k_w, k_g, k_b, k_m, k_v, k_in2 = jax.random.split(key, 7)
    inputs = jax.random.normal(k_in, (N, T, Cin), dtype=jnp.float32)
    weight = jax.random.normal(k_w, (Cin, U), dtype=jnp.float32) * 0.1   # Linear.weight.T
    gamma = jax.random.normal(k_g, (U,), dtype=jnp.float32) * 0.1 + 1.0
    beta = jax.random.normal(k_b, (U,), dtype=jnp.float32) * 0.1
    running_mean = jax.random.normal(k_m, (U,), dtype=jnp.float32) * 0.1
    running_var = jax.random.uniform(k_v, (U,), dtype=jnp.float32, minval=0.5, maxval=1.5)

    # Main check (whole batch in one tile).
    out = jax.block_until_ready(
        vfe_layer(inputs, weight, gamma, beta, running_mean, running_var))
    ref = vfe_layer_ref(inputs, weight, gamma, beta, running_mean, running_var)
    assert out.shape == (N, T, out_channels), out.shape
    assert jnp.allclose(out, ref, atol=1e-4, rtol=1e-4), "mismatch vs reference"

    # Multi-block with N not divisible by block_n: exercises the clamped last block
    # (no wrapper pad / slice passes).
    N2 = 20
    inputs2 = jax.random.normal(k_in2, (N2, T, Cin), dtype=jnp.float32)
    out2 = jax.block_until_ready(
        vfe_layer(inputs2, weight, gamma, beta, running_mean, running_var, block_n=8))
    ref2 = vfe_layer_ref(inputs2, weight, gamma, beta, running_mean, running_var)
    assert out2.shape == (N2, T, out_channels), out2.shape
    assert jnp.allclose(out2, ref2, atol=1e-4, rtol=1e-4), "mismatch vs reference (tail block)"

    print("KERNEL_OK")
</pallas_src>

<mosaic_0001>
module attributes {stable_mosaic.version = 11 : i64} {
  func.func @_vfe_kernel(%arg0: i32, %arg1: memref<8x32xf32, #tpu.memory_space<vmem>>, %arg2: memref<4x16xf32, #tpu.memory_space<vmem>>, %arg3: memref<1x16xf32, #tpu.memory_space<vmem>>, %arg4: memref<8x256xf32, #tpu.memory_space<vmem>>) attributes {dimension_semantics = [#tpu.dimension_semantics<parallel>], iteration_bounds = array<i64: 1>, scalar_prefetch = 0 : i64, scratch_operands = 0 : i64, tpu.core_type = #tpu.core_type<tc>, window_params = [{transform_indices = @transform_0, window_bounds = array<i64: 8, 32>}, {pipeline_mode = #tpu.pipeline_mode<synchronous>, transform_indices = @transform_1, window_bounds = array<i64: 4, 16>}, {pipeline_mode = #tpu.pipeline_mode<synchronous>, transform_indices = @transform_2, window_bounds = array<i64: 1, 16>}, {transform_indices = @transform_3, window_bounds = array<i64: 8, 256>}]} {
    %c0 = arith.constant 0 : index
    %c0_0 = arith.constant 0 : index
    %0 = vector.load %arg2[%c0, %c0_0] : memref<4x16xf32, #tpu.memory_space<vmem>>, vector<4x16xf32>
    %c0_1 = arith.constant 0 : index
    %c0_2 = arith.constant 0 : index
    %1 = vector.load %arg3[%c0_1, %c0_2] : memref<1x16xf32, #tpu.memory_space<vmem>>, vector<1x16xf32>
    %c0_3 = arith.constant 0 : index
    %c0_4 = arith.constant 0 : index
    %2 = vector.load %arg1[%c0_3, %c0_4] : memref<8x32xf32, #tpu.memory_space<vmem>>, vector<8x4xf32>
    %cst = arith.constant dense<0.000000e+00> : vector<8x16xf32>
    %3 = tpu.matmul %2, %0, %cst {dimension_numbers = #tpu.dot_dimension_numbers<[1], [0], [0], [1], [0, 0, 1, 1], [], []>} : vector<8x4xf32>, vector<4x16xf32>, vector<8x16xf32> -> vector<8x16xf32>
    %4 = vector.broadcast %1 : vector<1x16xf32> to vector<8x16xf32>
    %5 = arith.addf %3, %4 : vector<8x16xf32>
    %cst_5 = arith.constant 0.000000e+00 : f32
    %6 = vector.broadcast %cst_5 : f32 to vector<8x16xf32>
    %7 = arith.maximumf %5, %6 : vector<8x16xf32>
    %c0_6 = arith.constant 0 : index
    %c0_7 = arith.constant 0 : index
    %8 = vector.load %arg4[%c0_6, %c0_7] : memref<8x256xf32, #tpu.memory_space<vmem>>, vector<8x16xf32>
    tpu.vector_store %arg4[%c0_6, %c0_7], %7 {strides = array<i32>} : memref<8x256xf32, #tpu.memory_space<vmem>>, vector<8x16xf32>,
    %c0_8 = arith.constant 0 : index
    %c4 = arith.constant 4 : index
    %9 = vector.load %arg1[%c0_8, %c4] : memref<8x32xf32, #tpu.memory_space<vmem>>, vector<8x4xf32>
    %cst_9 = arith.constant dense<0.000000e+00> : vector<8x16xf32>
    %10 = tpu.matmul %9, %0, %cst_9 {dimension_numbers = #tpu.dot_dimension_numbers<[1], [0], [0], [1], [0, 0, 1, 1], [], []>} : vector<8x4xf32>, vector<4x16xf32>, vector<8x16xf32> -> vector<8x16xf32>
    %11 = vector.broadcast %1 : vector<1x16xf32> to vector<8x16xf32>
    %12 = arith.addf %10, %11 : vector<8x16xf32>
    %cst_10 = arith.constant 0.000000e+00 : f32
    %13 = vector.broadcast %cst_10 : f32 to vector<8x16xf32>
    %14 = arith.maximumf %12, %13 : vector<8x16xf32>
    %c0_11 = arith.constant 0 : index
    %c32 = arith.constant 32 : index
    %15 = vector.load %arg4[%c0_11, %c32] : memref<8x256xf32, #tpu.memory_space<vmem>>, vector<8x16xf32>
    tpu.vector_store %arg4[%c0_11, %c32], %14 {strides = array<i32>} : memref<8x256xf32, #tpu.memory_space<vmem>>, vector<8x16xf32>,
    %16 = arith.maximumf %7, %14 : vector<8x16xf32>
    %c0_12 = arith.constant 0 : index
    %c8 = arith.constant 8 : index
    %17 = vector.load %arg1[%c0_12, %c8] : memref<8x32xf32, #tpu.memory_space<vmem>>, vector<8x4xf32>
    %cst_13 = arith.constant dense<0.000000e+00> : vector<8x16xf32>
    %18 = tpu.matmul %17, %0, %cst_13 {dimension_numbers = #tpu.dot_dimension_numbers<[1], [0], [0], [1], [0, 0, 1, 1], [], []>} : vector<8x4xf32>, vector<4x16xf32>, vector<8x16xf32> -> vector<8x16xf32>
    %19 = vector.broadcast %1 : vector<1x16xf32> to vector<8x16xf32>
    %20 = arith.addf %18, %19 : vector<8x16xf32>
    %cst_14 = arith.constant 0.000000e+00 : f32
    %21 = vector.broadcast %cst_14 : f32 to vector<8x16xf32>
    %22 = arith.maximumf %20, %21 : vector<8x16xf32>
    %c0_15 = arith.constant 0 : index
    %c64 = arith.constant 64 : index
    %23 = vector.load %arg4[%c0_15, %c64] : memref<8x256xf32, #tpu.memory_space<vmem>>, vector<8x16xf32>
    tpu.vector_store %arg4[%c0_15, %c64], %22 {strides = array<i32>} : memref<8x256xf32, #tpu.memory_space<vmem>>, vector<8x16xf32>,
    %24 = arith.maximumf %16, %22 : vector<8x16xf32>
    %c0_16 = arith.constant 0 : index
    %c12 = arith.constant 12 : index
    %25 = vector.load %arg1[%c0_16, %c12] : memref<8x32xf32, #tpu.memory_space<vmem>>, vector<8x4xf32>
    %cst_17 = arith.constant dense<0.000000e+00> : vector<8x16xf32>
    %26 = tpu.matmul %25, %0, %cst_17 {dimension_numbers = #tpu.dot_dimension_numbers<[1], [0], [0], [1], [0, 0, 1, 1], [], []>} : vector<8x4xf32>, vector<4x16xf32>, vector<8x16xf32> -> vector<8x16xf32>
    %27 = vector.broadcast %1 : vector<1x16xf32> to vector<8x16xf32>
    %28 = arith.addf %26, %27 : vector<8x16xf32>
    %cst_18 = arith.constant 0.000000e+00 : f32
    %29 = vector.broadcast %cst_18 : f32 to vector<8x16xf32>
    %30 = arith.maximumf %28, %29 : vector<8x16xf32>
    %c0_19 = arith.constant 0 : index
    %c96 = arith.constant 96 : index
    %31 = vector.load %arg4[%c0_19, %c96] : memref<8x256xf32, #tpu.memory_space<vmem>>, vector<8x16xf32>
    tpu.vector_store %arg4[%c0_19, %c96], %30 {strides = array<i32>} : memref<8x256xf32, #tpu.memory_space<vmem>>, vector<8x16xf32>,
    %32 = arith.maximumf %24, %30 : vector<8x16xf32>
    %c0_20 = arith.constant 0 : index
    %c16 = arith.constant 16 : index
    %33 = vector.load %arg1[%c0_20, %c16] : memref<8x32xf32, #tpu.memory_space<vmem>>, vector<8x4xf32>
    %cst_21 = arith.constant dense<0.000000e+00> : vector<8x16xf32>
    %34 = tpu.matmul %33, %0, %cst_21 {dimension_numbers = #tpu.dot_dimension_numbers<[1], [0], [0], [1], [0, 0, 1, 1], [], []>} : vector<8x4xf32>, vector<4x16xf32>, vector<8x16xf32> -> vector<8x16xf32>
    %35 = vector.broadcast %1 : vector<1x16xf32> to vector<8x16xf32>
    %36 = arith.addf %34, %35 : vector<8x16xf32>
    %cst_22 = arith.constant 0.000000e+00 : f32
    %37 = vector.broadcast %cst_22 : f32 to vector<8x16xf32>
    %38 = arith.maximumf %36, %37 : vector<8x16xf32>
    %c0_23 = arith.constant 0 : index
    %c128 = arith.constant 128 : index
    %39 = vector.load %arg4[%c0_23, %c128] : memref<8x256xf32, #tpu.memory_space<vmem>>, vector<8x16xf32>
    tpu.vector_store %arg4[%c0_23, %c128], %38 {strides = array<i32>} : memref<8x256xf32, #tpu.memory_space<vmem>>, vector<8x16xf32>,
    %40 = arith.maximumf %32, %38 : vector<8x16xf32>
    %c0_24 = arith.constant 0 : index
    %c20 = arith.constant 20 : index
    %41 = vector.load %arg1[%c0_24, %c20] : memref<8x32xf32, #tpu.memory_space<vmem>>, vector<8x4xf32>
    %cst_25 = arith.constant dense<0.000000e+00> : vector<8x16xf32>
    %42 = tpu.matmul %41, %0, %cst_25 {dimension_numbers = #tpu.dot_dimension_numbers<[1], [0], [0], [1], [0, 0, 1, 1], [], []>} : vector<8x4xf32>, vector<4x16xf32>, vector<8x16xf32> -> vector<8x16xf32>
    %43 = vector.broadcast %1 : vector<1x16xf32> to vector<8x16xf32>
    %44 = arith.addf %42, %43 : vector<8x16xf32>
    %cst_26 = arith.constant 0.000000e+00 : f32
    %45 = vector.broadcast %cst_26 : f32 to vector<8x16xf32>
    %46 = arith.maximumf %44, %45 : vector<8x16xf32>
    %c0_27 = arith.constant 0 : index
    %c160 = arith.constant 160 : index
    %47 = vector.load %arg4[%c0_27, %c160] : memref<8x256xf32, #tpu.memory_space<vmem>>, vector<8x16xf32>
    tpu.vector_store %arg4[%c0_27, %c160], %46 {strides = array<i32>} : memref<8x256xf32, #tpu.memory_space<vmem>>, vector<8x16xf32>,
    %48 = arith.maximumf %40, %46 : vector<8x16xf32>
    %c0_28 = arith.constant 0 : index
    %c24 = arith.constant 24 : index
    %49 = vector.load %arg1[%c0_28, %c24] : memref<8x32xf32, #tpu.memory_space<vmem>>, vector<8x4xf32>
    %cst_29 = arith.constant dense<0.000000e+00> : vector<8x16xf32>
    %50 = tpu.matmul %49, %0, %cst_29 {dimension_numbers = #tpu.dot_dimension_numbers<[1], [0], [0], [1], [0, 0, 1, 1], [], []>} : vector<8x4xf32>, vector<4x16xf32>, vector<8x16xf32> -> vector<8x16xf32>
    %51 = vector.broadcast %1 : vector<1x16xf32> to vector<8x16xf32>
    %52 = arith.addf %50, %51 : vector<8x16xf32>
    %cst_30 = arith.constant 0.000000e+00 : f32
    %53 = vector.broadcast %cst_30 : f32 to vector<8x16xf32>
    %54 = arith.maximumf %52, %53 : vector<8x16xf32>
    %c0_31 = arith.constant 0 : index
    %c192 = arith.constant 192 : index
    %55 = vector.load %arg4[%c0_31, %c192] : memref<8x256xf32, #tpu.memory_space<vmem>>, vector<8x16xf32>
    tpu.vector_store %arg4[%c0_31, %c192], %54 {strides = array<i32>} : memref<8x256xf32, #tpu.memory_space<vmem>>, vector<8x16xf32>,
    %56 = arith.maximumf %48, %54 : vector<8x16xf32>
    %c0_32 = arith.constant 0 : index
    %c28 = arith.constant 28 : index
    %57 = vector.load %arg1[%c0_32, %c28] : memref<8x32xf32, #tpu.memory_space<vmem>>, vector<8x4xf32>
    %cst_33 = arith.constant dense<0.000000e+00> : vector<8x16xf32>
    %58 = tpu.matmul %57, %0, %cst_33 {dimension_numbers = #tpu.dot_dimension_numbers<[1], [0], [0], [1], [0, 0, 1, 1], [], []>} : vector<8x4xf32>, vector<4x16xf32>, vector<8x16xf32> -> vector<8x16xf32>
    %59 = vector.broadcast %1 : vector<1x16xf32> to vector<8x16xf32>
    %60 = arith.addf %58, %59 : vector<8x16xf32>
    %cst_34 = arith.constant 0.000000e+00 : f32
    %61 = vector.broadcast %cst_34 : f32 to vector<8x16xf32>
    %62 = arith.maximumf %60, %61 : vector<8x16xf32>
    %c0_35 = arith.constant 0 : index
    %c224 = arith.constant 224 : index
    %63 = vector.load %arg4[%c0_35, %c224] : memref<8x256xf32, #tpu.memory_space<vmem>>, vector<8x16xf32>
    tpu.vector_store %arg4[%c0_35, %c224], %62 {strides = array<i32>} : memref<8x256xf32, #tpu.memory_space<vmem>>, vector<8x16xf32>,
    %64 = arith.maximumf %56, %62 : vector<8x16xf32>
    %c0_36 = arith.constant 0 : index
    %c16_37 = arith.constant 16 : index
    %65 = vector.load %arg4[%c0_36, %c16_37] : memref<8x256xf32, #tpu.memory_space<vmem>>, vector<8x16xf32>
    tpu.vector_store %arg4[%c0_36, %c16_37], %64 {strides = array<i32>} : memref<8x256xf32, #tpu.memory_space<vmem>>, vector<8x16xf32>,
    %c0_38 = arith.constant 0 : index
    %c48 = arith.constant 48 : index
    %66 = vector.load %arg4[%c0_38, %c48] : memref<8x256xf32, #tpu.memory_space<vmem>>, vector<8x16xf32>
    tpu.vector_store %arg4[%c0_38, %c48], %64 {strides = array<i32>} : memref<8x256xf32, #tpu.memory_space<vmem>>, vector<8x16xf32>,
    %c0_39 = arith.constant 0 : index
    %c80 = arith.constant 80 : index
    %67 = vector.load %arg4[%c0_39, %c80] : memref<8x256xf32, #tpu.memory_space<vmem>>, vector<8x16xf32>
    tpu.vector_store %arg4[%c0_39, %c80], %64 {strides = array<i32>} : memref<8x256xf32, #tpu.memory_space<vmem>>, vector<8x16xf32>,
    %c0_40 = arith.constant 0 : index
    %c112 = arith.constant 112 : index
    %68 = vector.load %arg4[%c0_40, %c112] : memref<8x256xf32, #tpu.memory_space<vmem>>, vector<8x16xf32>
    tpu.vector_store %arg4[%c0_40, %c112], %64 {strides = array<i32>} : memref<8x256xf32, #tpu.memory_space<vmem>>, vector<8x16xf32>,
    %c0_41 = arith.constant 0 : index
    %c144 = arith.constant 144 : index
    %69 = vector.load %arg4[%c0_41, %c144] : memref<8x256xf32, #tpu.memory_space<vmem>>, vector<8x16xf32>
    tpu.vector_store %arg4[%c0_41, %c144], %64 {strides = array<i32>} : memref<8x256xf32, #tpu.memory_space<vmem>>, vector<8x16xf32>,
    %c0_42 = arith.constant 0 : index
    %c176 = arith.constant 176 : index
    %70 = vector.load %arg4[%c0_42, %c176] : memref<8x256xf32, #tpu.memory_space<vmem>>, vector<8x16xf32>
    tpu.vector_store %arg4[%c0_42, %c176], %64 {strides = array<i32>} : memref<8x256xf32, #tpu.memory_space<vmem>>, vector<8x16xf32>,
    %c0_43 = arith.constant 0 : index
    %c208 = arith.constant 208 : index
    %71 = vector.load %arg4[%c0_43, %c208] : memref<8x256xf32, #tpu.memory_space<vmem>>, vector<8x16xf32>
    tpu.vector_store %arg4[%c0_43, %c208], %64 {strides = array<i32>} : memref<8x256xf32, #tpu.memory_space<vmem>>, vector<8x16xf32>,
    %c0_44 = arith.constant 0 : index
    %c240 = arith.constant 240 : index
    %72 = vector.load %arg4[%c0_44, %c240] : memref<8x256xf32, #tpu.memory_space<vmem>>, vector<8x16xf32>
    tpu.vector_store %arg4[%c0_44, %c240], %64 {strides = array<i32>} : memref<8x256xf32, #tpu.memory_space<vmem>>, vector<8x16xf32>,
    return
  }
  func.func @transform_0(%arg0: i32) -> (i32, i32) {
    %c0_i32 = arith.constant 0 : i32
    %c0_i32_0 = arith.constant 0 : i32
    return %arg0, %c0_i32 : i32, i32
  }
  func.func @transform_1(%arg0: i32) -> (i32, i32) {
    %c0_i32 = arith.constant 0 : i32
    %c0_i32_0 = arith.constant 0 : i32
    %c0_i32_1 = arith.constant 0 : i32
    return %c0_i32, %c0_i32_0 : i32, i32
  }
  func.func @transform_2(%arg0: i32) -> (i32, i32) {
    %c0_i32 = arith.constant 0 : i32
    %c0_i32_0 = arith.constant 0 : i32
    %c0_i32_1 = arith.constant 0 : i32
    return %c0_i32, %c0_i32_0 : i32, i32
  }
  func.func @transform_3(%arg0: i32) -> (i32, i32) {
    %c0_i32 = arith.constant 0 : i32
    %c0_i32_0 = arith.constant 0 : i32
    return %arg0, %c0_i32 : i32, i32
  }
}

</mosaic_0001>

<llo_original>
// kernel: tpu_custom_call.1
$region0: #{tpu_custom_call.1}
  #allocation0 [shape = 'u32[]', space=smem, size = 0x4, offset = 0x4, fixed_abs, tag = 'smem constant byte address 0x4 - core index']
  #allocation1 [shape = 'u32[144,128]{1,0:T(1,128)}', space=vmem, size = 0x12000, scoped, tag = 'internal scratch']
  %s0 = inlined_call_operand.hbm [shape: f32[8,32], index: 0, kind: input, shape index: {}]
  %s1 = inlined_call_operand.hbm [shape: f32[4,16], index: 1, kind: input, shape index: {}]
  %s2 = inlined_call_operand.vmem [shape: f32[1,16], index: 2, kind: input, shape index: {}]
  %s3 = inlined_call_operand.hbm [shape: f32[8,256], index: 3, kind: output, shape index: {}]
  %s4 = sld [smem:[#allocation0]]
  $region30: #{tpu_custom_call.1} parent=0
    _
  %s6 = ssub.s32 1, %s4
  %s7 = scalar_select 0, %s6, %s4
  $region1: #{tpu_custom_call.1} parent=0
    #allocation2 [shape = 'u8[4096]{0}', space=vmem, size = 0x1000, scoped, tag = 'input window, operand 0, single buffered']
    #allocation3 [shape = 's32[1]{0}', space=sflag, size = 0x4, scoped, tag = 'scoped memory for tpu_custom_call.1']
    #allocation4 [shape = 's32[1]{0}', space=sflag, size = 0x4, scoped, tag = 'scoped memory for tpu_custom_call.1']
    #allocation5 [shape = 'u8[2048]{0}', space=vmem, size = 0x800, scoped, tag = 'input window, operand 1, single buffered']
    #allocation6 [shape = 's32[1]{0}', space=sflag, size = 0x4, scoped, tag = 'scoped memory for tpu_custom_call.1']
    #allocation7 [shape = 'u8[8192]{0}', space=vmem, size = 0x2000, scoped, tag = 'output window, operand 0, single buffered']
    %8 = vsyncpa [#allocation3], 0
    %9 = vsyncpa [#allocation6], 0
    %10 = vsyncpa [#allocation4], 0
    // Predicated region
    $region2: #{tpu_custom_call.1} parent=1 // pred_check
      _
    $region3: #{tpu_custom_call.1} parent=1 // pred_check_branch
      %12 = sbr.rel (0) target = $region5
    $region4: #{tpu_custom_call.1} parent=1 // pred_region
      %s14 = ssub.s32 128, 128
      %15 = vsyncadd [#allocation3], %s14
      %s17 = sshll.u32 [#allocation2], 4
      %s18 = int_to_ptr.vmem [resolvable:$true] %s17
      %20 = dma.hbm_to_vmem [thread:$0]  %s0, 128, %s18, [#allocation3]
    $region5: #{tpu_custom_call.1} parent=1 // pred_fallthru
      _
    // Predicated region
    $region6: #{tpu_custom_call.1} parent=1 // pred_check
      _
    $region7: #{tpu_custom_call.1} parent=1 // pred_check_branch
      %22 = sbr.rel (0) target = $region9
    $region8: #{tpu_custom_call.1} parent=1 // pred_region
      %s24 = ssub.s32 64, 64
      %25 = vsyncadd [#allocation6], %s24
      %s27 = sshll.u32 [#allocation5], 4
      %s28 = int_to_ptr.vmem [resolvable:$true] %s27
      %30 = dma.hbm_to_vmem [thread:$0]  %s1, 64, %s28, [#allocation6]
    $region9: #{tpu_custom_call.1} parent=1 // pred_fallthru
      _
    // Predicated region
    $region10: #{tpu_custom_call.1} parent=1 // pred_check
      _
    $region11: #{tpu_custom_call.1} parent=1 // pred_check_branch
      %32 = sbr.rel (0) target = $region13
    $region12: #{tpu_custom_call.1} parent=1 // pred_region
      _
    $region13: #{tpu_custom_call.1} parent=1 // pred_fallthru
      _
    // Predicated region
    $region14: #{tpu_custom_call.1} parent=1 // pred_check
      _
    $region15: #{tpu_custom_call.1} parent=1 // pred_check_branch
      %34 = sbr.rel (0) target = $region17
    $region16: #{tpu_custom_call.1} parent=1 // pred_region
      %35 = dma.done [#allocation3], 128
    $region17: #{tpu_custom_call.1} parent=1 // pred_fallthru
      _
    // Predicated region
    $region18: #{tpu_custom_call.1} parent=1 // pred_check
      _
    $region19: #{tpu_custom_call.1} parent=1 // pred_check_branch
      %37 = sbr.rel (0) target = $region21
    $region20: #{tpu_custom_call.1} parent=1 // pred_region
      %38 = dma.done [#allocation6], 64
    $region21: #{tpu_custom_call.1} parent=1 // pred_fallthru
      _
    %v39 = vld [vmem:[#allocation5] sm:$0xf]
    %v40 = vld [vmem:[%s2] sm:$0x1]
    %v41 = vld [vmem:[#allocation2] sm:$0xff]
    %v43 = vlaneseq
    %v44 = vshrl.u32 %v43, 7
    %v45 = vsub.s32 0, %v44
    %v46 = vrot.slane %v40, %v45
    %vm48 = vcmask 31744
    %v50 = vsel %vm48, %v41, 0
    %vm52 = vcmask 1043456
    %v54 = vsel %vm52, %v39, 0
    %56 = vmatprep.subr.mxu0 0.0
    %57 = vmatpush1.msra.mxu0 0.0
    %58 = vmatprep.subr.mxu0 0.0
    %59 = vmatpush1.msra.mxu0 0.0
    %60 = vmatprep.subr.mxu0 0.0
    %61 = vmatpush1.msra.mxu0 0.0
    %62 = vmatprep.subr.mxu0 0.0
    %63 = vmatpush1.msra.mxu0 0.0
    %64 = vmatprep.subr.mxu0 0.0
    %65 = vmatpush1.msra.mxu0 0.0
    %66 = vmatprep.subr.mxu0 0.0
    %67 = vmatpush1.msra.mxu0 0.0
    %68 = vmatprep.subr.mxu0 0.0
    %69 = vmatpush1.msra.mxu0 0.0
    %70 = vmatprep.subr.mxu0 0.0
    %71 = vmatpush1.msra.mxu0 0.0
    %72 = vmatprep.subr.mxu0 0.0
    %73 = vmatpush1.msra.mxu0 0.0
    %74 = vmatprep.subr.mxu0 0.0
    %75 = vmatpush1.msra.mxu0 0.0
    %76 = vmatprep.subr.mxu0 0.0
    %77 = vmatpush1.msra.mxu0 0.0
    %78 = vmatprep.subr.mxu0 0.0
    %79 = vmatpush1.msra.mxu0 0.0
    %80 = vmatprep.subr.mxu0 0.0
    %81 = vmatpush1.msra.mxu0 0.0
    %82 = vmatprep.subr.mxu0 0.0
    %83 = vmatpush1.msra.mxu0 0.0
    %84 = vmatprep.subr.mxu0 0.0
    %85 = vmatpush1.msra.mxu0 0.0
    %86 = vmatprep.subr.mxu0 0.0
    %87 = vmatpush1.msra.mxu0 %v54
    %88 = vmatprep.subr.mxu0 0.0
    %89 = vmatpush2.msra.mxu0 0.0
    %90 = vmatprep.subr.mxu0 0.0
    %91 = vmatpush2.msra.mxu0 0.0
    %92 = vmatprep.subr.mxu0 0.0
    %93 = vmatpush2.msra.mxu0 0.0
    %94 = vmatprep.subr.mxu0 0.0
    %95 = vmatpush2.msra.mxu0 0.0
    %96 = vmatprep.subr.mxu0 0.0
    %97 = vmatpush2.msra.mxu0 0.0
    %98 = vmatprep.subr.mxu0 0.0
    %99 = vmatpush2.msra.mxu0 0.0
    %100 = vmatprep.subr.mxu0 0.0
    %101 = vmatpush2.msra.mxu0 0.0
    %102 = vmatprep.subr.mxu0 0.0
    %103 = vmatpush2.msra.mxu0 0.0
    %104 = vmatprep.subr.mxu0 0.0
    %105 = vmatpush2.msra.mxu0 0.0
    %106 = vmatprep.subr.mxu0 0.0
    %107 = vmatpush2.msra.mxu0 0.0
    %108 = vmatprep.subr.mxu0 0.0
    %109 = vmatpush2.msra.mxu0 0.0
    %110 = vmatprep.subr.mxu0 0.0
    %111 = vmatpush2.msra.mxu0 0.0
    %112 = vmatprep.subr.mxu0 0.0
    %113 = vmatpush2.msra.mxu0 0.0
    %114 = vmatprep.subr.mxu0 0.0
    %115 = vmatpush2.msra.mxu0 0.0
    %116 = vmatprep.subr.mxu0 0.0
    %117 = vmatpush2.msra.mxu0 0.0
    %118 = vmatprep.subr.mxu0 0.0
    %119 = vmatpush2.msra.mxu0 0.0
    %120 = vmatprep.mubr.f32.mxu0 0.0
    %121 = vmatmul.mubr.f32.gmra.mxu0 %v50
    %v122 = vpop.f32.mrf.mxu0
    %v123 = vadd.f32 %v46, %v122
    %v124 = vpop.f32.mrf.mxu0
    %125 = vdwg.mxu0
    %v126 = vmax.f32 %v123, 0.0
    %vm127 = vcmask 130048
    %128 = vst.msk [vmem:[#allocation7] sm:$0xff] %vm127, %v126
    %v129 = vld [vmem:[#allocation2] sm:$0xff]
    %131 = vrot.lane.b32.xlu0 %v129, 124
    %v132 = vpop.permute.xlu0 %131
    %v133 = vsel %vm48, %v132, 0
    %135 = vmatprep.subr.mxu0 0.0
    %136 = vmatpush1.msra.mxu0 0.0
    %137 = vmatprep.subr.mxu0 0.0
    %138 = vmatpush1.msra.mxu0 0.0
    %139 = vmatprep.subr.mxu0 0.0
    %140 = vmatpush1.msra.mxu0 0.0
    %141 = vmatprep.subr.mxu0 0.0
    %142 = vmatpush1.msra.mxu0 0.0
    %143 = vmatprep.subr.mxu0 0.0
    %144 = vmatpush1.msra.mxu0 0.0
    %145 = vmatprep.subr.mxu0 0.0
    %146 = vmatpush1.msra.mxu0 0.0
    %147 = vmatprep.subr.mxu0 0.0
    %148 = vmatpush1.msra.mxu0 0.0
    %149 = vmatprep.subr.mxu0 0.0
    %150 = vmatpush1.msra.mxu0 0.0
    %151 = vmatprep.subr.mxu0 0.0
    %152 = vmatpush1.msra.mxu0 0.0
    %153 = vmatprep.subr.mxu0 0.0
    %154 = vmatpush1.msra.mxu0 0.0
    %155 = vmatprep.subr.mxu0 0.0
    %156 = vmatpush1.msra.mxu0 0.0
    %157 = vmatprep.subr.mxu0 0.0
    %158 = vmatpush1.msra.mxu0 0.0
    %159 = vmatprep.subr.mxu0 0.0
    %160 = vmatpush1.msra.mxu0 0.0
    %161 = vmatprep.subr.mxu0 0.0
    %162 = vmatpush1.msra.mxu0 0.0
    %163 = vmatprep.subr.mxu0 0.0
    %164 = vmatpush1.msra.mxu0 0.0
    %165 = vmatprep.subr.mxu0 0.0
    %166 = vmatpush1.msra.mxu0 %v54
    %167 = vmatprep.subr.mxu0 0.0
    %168 = vmatpush2.msra.mxu0 0.0
    %169 = vmatprep.subr.mxu0 0.0
    %170 = vmatpush2.msra.mxu0 0.0
    %171 = vmatprep.subr.mxu0 0.0
    %172 = vmatpush2.msra.mxu0 0.0
    %173 = vmatprep.subr.mxu0 0.0
    %174 = vmatpush2.msra.mxu0 0.0
    %175 = vmatprep.subr.mxu0 0.0
    %176 = vmatpush2.msra.mxu0 0.0
    %177 = vmatprep.subr.mxu0 0.0
    %178 = vmatpush2.msra.mxu0 0.0
    %179 = vmatprep.subr.mxu0 0.0
    %180 = vmatpush2.msra.mxu0 0.0
    %181 = vmatprep.subr.mxu0 0.0
    %182 = vmatpush2.msra.mxu0 0.0
    %183 = vmatprep.subr.mxu0 0.0
    %184 = vmatpush2.msra.mxu0 0.0
    %185 = vmatprep.subr.mxu0 0.0
    %186 = vmatpush2.msra.mxu0 0.0
    %187 = vmatprep.subr.mxu0 0.0
    %188 = vmatpush2.msra.mxu0 0.0
    %189 = vmatprep.subr.mxu0 0.0
    %190 = vmatpush2.msra.mxu0 0.0
    %191 = vmatprep.subr.mxu0 0.0
    %192 = vmatpush2.msra.mxu0 0.0
    %193 = vmatprep.subr.mxu0 0.0
    %194 = vmatpush2.msra.mxu0 0.0
    %195 = vmatprep.subr.mxu0 0.0
    %196 = vmatpush2.msra.mxu0 0.0
    %197 = vmatprep.subr.mxu0 0.0
    %198 = vmatpush2.msra.mxu0 0.0
    %199 = vmatprep.mubr.f32.mxu0 0.0
    %200 = vmatmul.mubr.f32.gmra.mxu0 %v133
    %v201 = vpop.f32.mrf.mxu0
    %v202 = vadd.f32 %v46, %v201
    %v203 = vpop.f32.mrf.mxu0
    %204 = vdwg.mxu0
    %v205 = vmax.f32 %v202, 0.0
    %207 = vrot.lane.b32.xlu0 %v205, 32
    %v208 = vpop.permute.xlu0 %207
    %vm210 = vcmask 392448
    %211 = vst.msk [vmem:[#allocation7] sm:$0xff] %vm210, %v208
    %v212 = vmax.f32 %v126, %v205
    %v213 = vld [vmem:[#allocation2] sm:$0xff]
    %215 = vrot.lane.b32.xlu0 %v213, 120
    %v216 = vpop.permute.xlu0 %215
    %v217 = vsel %vm48, %v216, 0
    %219 = vmatprep.subr.mxu0 0.0
    %220 = vmatpush1.msra.mxu0 0.0
    %221 = vmatprep.subr.mxu0 0.0
    %222 = vmatpush1.msra.mxu0 0.0
    %223 = vmatprep.subr.mxu0 0.0
    %224 = vmatpush1.msra.mxu0 0.0
    %225 = vmatprep.subr.mxu0 0.0
    %226 = vmatpush1.msra.mxu0 0.0
    %227 = vmatprep.subr.mxu0 0.0
    %228 = vmatpush1.msra.mxu0 0.0
    %229 = vmatprep.subr.mxu0 0.0
    %230 = vmatpush1.msra.mxu0 0.0
    %231 = vmatprep.subr.mxu0 0.0
    %232 = vmatpush1.msra.mxu0 0.0
    %233 = vmatprep.subr.mxu0 0.0
    %234 = vmatpush1.msra.mxu0 0.0
    %235 = vmatprep.subr.mxu0 0.0
    %236 = vmatpush1.msra.mxu0 0.0
    %237 = vmatprep.subr.mxu0 0.0
    %238 = vmatpush1.msra.mxu0 0.0
    %239 = vmatprep.subr.mxu0 0.0
    %240 = vmatpush1.msra.mxu0 0.0
    %241 = vmatprep.subr.mxu0 0.0
    %242 = vmatpush1.msra.mxu0 0.0
    %243 = vmatprep.subr.mxu0 0.0
    %244 = vmatpush1.msra.mxu0 0.0
    %245 = vmatprep.subr.mxu0 0.0
    %246 = vmatpush1.msra.mxu0 0.0
    %247 = vmatprep.subr.mxu0 0.0
    %248 = vmatpush1.msra.mxu0 0.0
    %249 = vmatprep.subr.mxu0 0.0
    %250 = vmatpush1.msra.mxu0 %v54
    %251 = vmatprep.subr.mxu0 0.0
    %252 = vmatpush2.msra.mxu0 0.0
    %253 = vmatprep.subr.mxu0 0.0
    %254 = vmatpush2.msra.mxu0 0.0
    %255 = vmatprep.subr.mxu0 0.0
    %256 = vmatpush2.msra.mxu0 0.0
    %257 = vmatprep.subr.mxu0 0.0
    %258 = vmatpush2.msra.mxu0 0.0
    %259 = vmatprep.subr.mxu0 0.0
    %260 = vmatpush2.msra.mxu0 0.0
    %261 = vmatprep.subr.mxu0 0.0
    %262 = vmatpush2.msra.mxu0 0.0
    %263 = vmatprep.subr.mxu0 0.0
    %264 = vmatpush2.msra.mxu0 0.0
    %265 = vmatprep.subr.mxu0 0.0
    %266 = vmatpush2.msra.mxu0 0.0
    %267 = vmatprep.subr.mxu0 0.0
    %268 = vmatpush2.msra.mxu0 0.0
    %269 = vmatprep.subr.mxu0 0.0
    %270 = vmatpush2.msra.mxu0 0.0
    %271 = vmatprep.subr.mxu0 0.0
    %272 = vmatpush2.msra.mxu0 0.0
    %273 = vmatprep.subr.mxu0 0.0
    %274 = vmatpush2.msra.mxu0 0.0
    %275 = vmatprep.subr.mxu0 0.0
    %276 = vmatpush2.msra.mxu0 0.0
    %277 = vmatprep.subr.mxu0 0.0
    %278 = vmatpush2.msra.mxu0 0.0
    %279 = vmatprep.subr.mxu0 0.0
    %280 = vmatpush2.msra.mxu0 0.0
    %281 = vmatprep.subr.mxu0 0.0
    %282 = vmatpush2.msra.mxu0 0.0
    %283 = vmatprep.mubr.f32.mxu0 0.0
    %284 = vmatmul.mubr.f32.gmra.mxu0 %v217
    %v285 = vpop.f32.mrf.mxu0
    %v286 = vadd.f32 %v46, %v285
    %v287 = vpop.f32.mrf.mxu0
    %288 = vdwg.mxu0
    %v289 = vmax.f32 %v286, 0.0
    %291 = vrot.lane.b32.xlu0 %v289, 64
    %v292 = vpop.permute.xlu0 %291
    %vm294 = vcmask 654848
    %295 = vst.msk [vmem:[#allocation7] sm:$0xff] %vm294, %v292
    %v296 = vmax.f32 %v212, %v289
    %v297 = vld [vmem:[#allocation2] sm:$0xff]
    %299 = vrot.lane.b32.xlu0 %v297, 116
    %v300 = vpop.permute.xlu0 %299
    %v301 = vsel %vm48, %v300, 0
    %303 = vmatprep.subr.mxu0 0.0
    %304 = vmatpush1.msra.mxu0 0.0
    %305 = vmatprep.subr.mxu0 0.0
    %306 = vmatpush1.msra.mxu0 0.0
    %307 = vmatprep.subr.mxu0 0.0
    %308 = vmatpush1.msra.mxu0 0.0
    %309 = vmatprep.subr.mxu0 0.0
    %310 = vmatpush1.msra.mxu0 0.0
    %311 = vmatprep.subr.mxu0 0.0
    %312 = vmatpush1.msra.mxu0 0.0
    %313 = vmatprep.subr.mxu0 0.0
    %314 = vmatpush1.msra.mxu0 0.0
    %315 = vmatprep.subr.mxu0 0.0
    %316 = vmatpush1.msra.mxu0 0.0
    %317 = vmatprep.subr.mxu0 0.0
    %318 = vmatpush1.msra.mxu0 0.0
    %319 = vmatprep.subr.mxu0 0.0
    %320 = vmatpush1.msra.mxu0 0.0
    %321 = vmatprep.subr.mxu0 0.0
    %322 = vmatpush1.msra.mxu0 0.0
    %323 = vmatprep.subr.mxu0 0.0
    %324 = vmatpush1.msra.mxu0 0.0
    %325 = vmatprep.subr.mxu0 0.0
    %326 = vmatpush1.msra.mxu0 0.0
    %327 = vmatprep.subr.mxu0 0.0
    %328 = vmatpush1.msra.mxu0 0.0
    %329 = vmatprep.subr.mxu0 0.0
    %330 = vmatpush1.msra.mxu0 0.0
    %331 = vmatprep.subr.mxu0 0.0
    %332 = vmatpush1.msra.mxu0 0.0
    %333 = vmatprep.subr.mxu0 0.0
    %334 = vmatpush1.msra.mxu0 %v54
    %335 = vmatprep.subr.mxu0 0.0
    %336 = vmatpush2.msra.mxu0 0.0
    %337 = vmatprep.subr.mxu0 0.0
    %338 = vmatpush2.msra.mxu0 0.0
    %339 = vmatprep.subr.mxu0 0.0
    %340 = vmatpush2.msra.mxu0 0.0
    %341 = vmatprep.subr.mxu0 0.0
    %342 = vmatpush2.msra.mxu0 0.0
    %343 = vmatprep.subr.mxu0 0.0
    %344 = vmatpush2.msra.mxu0 0.0
    %345 = vmatprep.subr.mxu0 0.0
    %346 = vmatpush2.msra.mxu0 0.0
    %347 = vmatprep.subr.mxu0 0.0
    %348 = vmatpush2.msra.mxu0 0.0
    %349 = vmatprep.subr.mxu0 0.0
    %350 = vmatpush2.msra.mxu0 0.0
    %351 = vmatprep.subr.mxu0 0.0
    %352 = vmatpush2.msra.mxu0 0.0
    %353 = vmatprep.subr.mxu0 0.0
    %354 = vmatpush2.msra.mxu0 0.0
    %355 = vmatprep.subr.mxu0 0.0
    %356 = vmatpush2.msra.mxu0 0.0
    %357 = vmatprep.subr.mxu0 0.0
    %358 = vmatpush2.msra.mxu0 0.0
    %359 = vmatprep.subr.mxu0 0.0
    %360 = vmatpush2.msra.mxu0 0.0
    %361 = vmatprep.subr.mxu0 0.0
    %362 = vmatpush2.msra.mxu0 0.0
    %363 = vmatprep.subr.mxu0 0.0
    %364 = vmatpush2.msra.mxu0 0.0
    %365 = vmatprep.subr.mxu0 0.0
    %366 = vmatpush2.msra.mxu0 0.0
    %367 = vmatprep.mubr.f32.mxu0 0.0
    %368 = vmatmul.mubr.f32.gmra.mxu0 %v301
    %v369 = vpop.f32.mrf.mxu0
    %v370 = vadd.f32 %v46, %v369
    %v371 = vpop.f32.mrf.mxu0
    %372 = vdwg.mxu0
    %v373 = vmax.f32 %v370, 0.0
    %375 = vrot.lane.b32.xlu0 %v373, 96
    %v376 = vpop.permute.xlu0 %375
    %vm378 = vcmask 917248
    %379 = vst.msk [vmem:[#allocation7] sm:$0xff] %vm378, %v376
    %v380 = vmax.f32 %v296, %v373
    %v381 = vld [vmem:[#allocation2] sm:$0xff]
    %383 = vrot.lane.b32.xlu0 %v381, 112
    %v384 = vpop.permute.xlu0 %383
    %v385 = vsel %vm48, %v384, 0
    %387 = vmatprep.subr.mxu0 0.0
    %388 = vmatpush1.msra.mxu0 0.0
    %389 = vmatprep.subr.mxu0 0.0
    %390 = vmatpush1.msra.mxu0 0.0
    %391 = vmatprep.subr.mxu0 0.0
    %392 = vmatpush1.msra.mxu0 0.0
    %393 = vmatprep.subr.mxu0 0.0
    %394 = vmatpush1.msra.mxu0 0.0
    %395 = vmatprep.subr.mxu0 0.0
    %396 = vmatpush1.msra.mxu0 0.0
    %397 = vmatprep.subr.mxu0 0.0
    %398 = vmatpush1.msra.mxu0 0.0
    %399 = vmatprep.subr.mxu0 0.0
    %400 = vmatpush1.msra.mxu0 0.0
    %401 = vmatprep.subr.mxu0 0.0
    %402 = vmatpush1.msra.mxu0 0.0
    %403 = vmatprep.subr.mxu0 0.0
    %404 = vmatpush1.msra.mxu0 0.0
    %405 = vmatprep.subr.mxu0 0.0
    %406 = vmatpush1.msra.mxu0 0.0
    %407 = vmatprep.subr.mxu0 0.0
    %408 = vmatpush1.msra.mxu0 0.0
    %409 = vmatprep.subr.mxu0 0.0
    %410 = vmatpush1.msra.mxu0 0.0
    %411 = vmatprep.subr.mxu0 0.0
    %412 = vmatpush1.msra.mxu0 0.0
    %413 = vmatprep.subr.mxu0 0.0
    %414 = vmatpush1.msra.mxu0 0.0
    %415 = vmatprep.subr.mxu0 0.0
    %416 = vmatpush1.msra.mxu0 0.0
    %417 = vmatprep.subr.mxu0 0.0
    %418 = vmatpush1.msra.mxu0 %v54
    %419 = vmatprep.subr.mxu0 0.0
    %420 = vmatpush2.msra.mxu0 0.0
    %421 = vmatprep.subr.mxu0 0.0
    %422 = vmatpush2.msra.mxu0 0.0
    %423 = vmatprep.subr.mxu0 0.0
    %424 = vmatpush2.msra.mxu0 0.0
    %425 = vmatprep.subr.mxu0 0.0
    %426 = vmatpush2.msra.mxu0 0.0
    %427 = vmatprep.subr.mxu0 0.0
    %428 = vmatpush2.msra.mxu0 0.0
    %429 = vmatprep.subr.mxu0 0.0
    %430 = vmatpush2.msra.mxu0 0.0
    %431 = vmatprep.subr.mxu0 0.0
    %432 = vmatpush2.msra.mxu0 0.0
    %433 = vmatprep.subr.mxu0 0.0
    %434 = vmatpush2.msra.mxu0 0.0
    %435 = vmatprep.subr.mxu0 0.0
    %436 = vmatpush2.msra.mxu0 0.0
    %437 = vmatprep.subr.mxu0 0.0
    %438 = vmatpush2.msra.mxu0 0.0
    %439 = vmatprep.subr.mxu0 0.0
    %440 = vmatpush2.msra.mxu0 0.0
    %441 = vmatprep.subr.mxu0 0.0
    %442 = vmatpush2.msra.mxu0 0.0
    %443 = vmatprep.subr.mxu0 0.0
    %444 = vmatpush2.msra.mxu0 0.0
    %445 = vmatprep.subr.mxu0 0.0
    %446 = vmatpush2.msra.mxu0 0.0
    %447 = vmatprep.subr.mxu0 0.0
    %448 = vmatpush2.msra.mxu0 0.0
    %449 = vmatprep.subr.mxu0 0.0
    %450 = vmatpush2.msra.mxu0 0.0
    %451 = vmatprep.mubr.f32.mxu0 0.0
    %452 = vmatmul.mubr.f32.gmra.mxu0 %v385
    %v453 = vpop.f32.mrf.mxu0
    %v454 = vadd.f32 %v46, %v453
    %v455 = vpop.f32.mrf.mxu0
    %456 = vdwg.mxu0
    %v457 = vmax.f32 %v454, 0.0
    %458 = vst.msk [vmem:[#allocation7 + $0x8] sm:$0xff] %vm127, %v457
    %v459 = vmax.f32 %v380, %v457
    %v460 = vld [vmem:[#allocation2] sm:$0xff]
    %462 = vrot.lane.b32.xlu0 %v460, 108
    %v463 = vpop.permute.xlu0 %462
    %v464 = vsel %vm48, %v463, 0
    %466 = vmatprep.subr.mxu0 0.0
    %467 = vmatpush1.msra.mxu0 0.0
    %468 = vmatprep.subr.mxu0 0.0
    %469 = vmatpush1.msra.mxu0 0.0
    %470 = vmatprep.subr.mxu0 0.0
    %471 = vmatpush1.msra.mxu0 0.0
    %472 = vmatprep.subr.mxu0 0.0
    %473 = vmatpush1.msra.mxu0 0.0
    %474 = vmatprep.subr.mxu0 0.0
    %475 = vmatpush1.msra.mxu0 0.0
    %476 = vmatprep.subr.mxu0 0.0
    %477 = vmatpush1.msra.mxu0 0.0
    %478 = vmatprep.subr.mxu0 0.0
    %479 = vmatpush1.msra.mxu0 0.0
    %480 = vmatprep.subr.mxu0 0.0
    %481 = vmatpush1.msra.mxu0 0.0
    %482 = vmatprep.subr.mxu0 0.0
    %483 = vmatpush1.msra.mxu0 0.0
    %484 = vmatprep.subr.mxu0 0.0
    %485 = vmatpush1.msra.mxu0 0.0
    %486 = vmatprep.subr.mxu0 0.0
    %487 = vmatpush1.msra.mxu0 0.0
    %488 = vmatprep.subr.mxu0 0.0
    %489 = vmatpush1.msra.mxu0 0.0
    %490 = vmatprep.subr.mxu0 0.0
    %491 = vmatpush1.msra.mxu0 0.0
    %492 = vmatprep.subr.mxu0 0.0
    %493 = vmatpush1.msra.mxu0 0.0
    %494 = vmatprep.subr.mxu0 0.0
    %495 = vmatpush1.msra.mxu0 0.0
    %496 = vmatprep.subr.mxu0 0.0
    %497 = vmatpush1.msra.mxu0 %v54
    %498 = vmatprep.subr.mxu0 0.0
    %499 = vmatpush2.msra.mxu0 0.0
    %500 = vmatprep.subr.mxu0 0.0
    %501 = vmatpush2.msra.mxu0 0.0
    %502 = vmatprep.subr.mxu0 0.0
    %503 = vmatpush2.msra.mxu0 0.0
    %504 = vmatprep.subr.mxu0 0.0
    %505 = vmatpush2.msra.mxu0 0.0
    %506 = vmatprep.subr.mxu0 0.0
    %507 = vmatpush2.msra.mxu0 0.0
    %508 = vmatprep.subr.mxu0 0.0
    %509 = vmatpush2.msra.mxu0 0.0
    %510 = vmatprep.subr.mxu0 0.0
    %511 = vmatpush2.msra.mxu0 0.0
    %512 = vmatprep.subr.mxu0 0.0
    %513 = vmatpush2.msra.mxu0 0.0
    %514 = vmatprep.subr.mxu0 0.0
    %515 = vmatpush2.msra.mxu0 0.0
    %516 = vmatprep.subr.mxu0 0.0
    %517 = vmatpush2.msra.mxu0 0.0
    %518 = vmatprep.subr.mxu0 0.0
    %519 = vmatpush2.msra.mxu0 0.0
    %520 = vmatprep.subr.mxu0 0.0
    %521 = vmatpush2.msra.mxu0 0.0
    %522 = vmatprep.subr.mxu0 0.0
    %523 = vmatpush2.msra.mxu0 0.0
    %524 = vmatprep.subr.mxu0 0.0
    %525 = vmatpush2.msra.mxu0 0.0
    %526 = vmatprep.subr.mxu0 0.0
    %527 = vmatpush2.msra.mxu0 0.0
    %528 = vmatprep.subr.mxu0 0.0
    %529 = vmatpush2.msra.mxu0 0.0
    %530 = vmatprep.mubr.f32.mxu0 0.0
    %531 = vmatmul.mubr.f32.gmra.mxu0 %v464
    %v532 = vpop.f32.mrf.mxu0
    %v533 = vadd.f32 %v46, %v532
    %v534 = vpop.f32.mrf.mxu0
    %535 = vdwg.mxu0
    %v536 = vmax.f32 %v533, 0.0
    %538 = vrot.lane.b32.xlu0 %v536, 32
    %v539 = vpop.permute.xlu0 %538
    %541 = vst.msk [vmem:[#allocation7 + $0x8] sm:$0xff] %vm210, %v539
    %v542 = vmax.f32 %v459, %v536
    %v543 = vld [vmem:[#allocation2] sm:$0xff]
    %545 = vrot.lane.b32.xlu0 %v543, 104
    %v546 = vpop.permute.xlu0 %545
    %v547 = vsel %vm48, %v546, 0
    %549 = vmatprep.subr.mxu0 0.0
    %550 = vmatpush1.msra.mxu0 0.0
    %551 = vmatprep.subr.mxu0 0.0
    %552 = vmatpush1.msra.mxu0 0.0
    %553 = vmatprep.subr.mxu0 0.0
    %554 = vmatpush1.msra.mxu0 0.0
    %555 = vmatprep.subr.mxu0 0.0
    %556 = vmatpush1.msra.mxu0 0.0
    %557 = vmatprep.subr.mxu0 0.0
    %558 = vmatpush1.msra.mxu0 0.0
    %559 = vmatprep.subr.mxu0 0.0
    %560 = vmatpush1.msra.mxu0 0.0
    %561 = vmatprep.subr.mxu0 0.0
    %562 = vmatpush1.msra.mxu0 0.0
    %563 = vmatprep.subr.mxu0 0.0
    %564 = vmatpush1.msra.mxu0 0.0
    %565 = vmatprep.subr.mxu0 0.0
    %566 = vmatpush1.msra.mxu0 0.0
    %567 = vmatprep.subr.mxu0 0.0
    %568 = vmatpush1.msra.mxu0 0.0
    %569 = vmatprep.subr.mxu0 0.0
    %570 = vmatpush1.msra.mxu0 0.0
    %571 = vmatprep.subr.mxu0 0.0
    %572 = vmatpush1.msra.mxu0 0.0
    %573 = vmatprep.subr.mxu0 0.0
    %574 = vmatpush1.msra.mxu0 0.0
    %575 = vmatprep.subr.mxu0 0.0
    %576 = vmatpush1.msra.mxu0 0.0
    %577 = vmatprep.subr.mxu0 0.0
    %578 = vmatpush1.msra.mxu0 0.0
    %579 = vmatprep.subr.mxu0 0.0
    %580 = vmatpush1.msra.mxu0 %v54
    %581 = vmatprep.subr.mxu0 0.0
    %582 = vmatpush2.msra.mxu0 0.0
    %583 = vmatprep.subr.mxu0 0.0
    %584 = vmatpush2.msra.mxu0 0.0
    %585 = vmatprep.subr.mxu0 0.0
    %586 = vmatpush2.msra.mxu0 0.0
    %587 = vmatprep.subr.mxu0 0.0
    %588 = vmatpush2.msra.mxu0 0.0
    %589 = vmatprep.subr.mxu0 0.0
    %590 = vmatpush2.msra.mxu0 0.0
    %591 = vmatprep.subr.mxu0 0.0
    %592 = vmatpush2.msra.mxu0 0.0
    %593 = vmatprep.subr.mxu0 0.0
    %594 = vmatpush2.msra.mxu0 0.0
    %595 = vmatprep.subr.mxu0 0.0
    %596 = vmatpush2.msra.mxu0 0.0
    %597 = vmatprep.subr.mxu0 0.0
    %598 = vmatpush2.msra.mxu0 0.0
    %599 = vmatprep.subr.mxu0 0.0
    %600 = vmatpush2.msra.mxu0 0.0
    %601 = vmatprep.subr.mxu0 0.0
    %602 = vmatpush2.msra.mxu0 0.0
    %603 = vmatprep.subr.mxu0 0.0
    %604 = vmatpush2.msra.mxu0 0.0
    %605 = vmatprep.subr.mxu0 0.0
    %606 = vmatpush2.msra.mxu0 0.0
    %607 = vmatprep.subr.mxu0 0.0
    %608 = vmatpush2.msra.mxu0 0.0
    %609 = vmatprep.subr.mxu0 0.0
    %610 = vmatpush2.msra.mxu0 0.0
    %611 = vmatprep.subr.mxu0 0.0
    %612 = vmatpush2.msra.mxu0 0.0
    %613 = vmatprep.mubr.f32.mxu0 0.0
    %614 = vmatmul.mubr.f32.gmra.mxu0 %v547
    %v615 = vpop.f32.mrf.mxu0
    %v616 = vadd.f32 %v46, %v615
    %v617 = vpop.f32.mrf.mxu0
    %618 = vdwg.mxu0
    %v619 = vmax.f32 %v616, 0.0
    %621 = vrot.lane.b32.xlu0 %v619, 64
    %v622 = vpop.permute.xlu0 %621
    %624 = vst.msk [vmem:[#allocation7 + $0x8] sm:$0xff] %vm294, %v622
    %v625 = vmax.f32 %v542, %v619
    %v626 = vld [vmem:[#allocation2] sm:$0xff]
    %628 = vrot.lane.b32.xlu0 %v626, 100
    %v629 = vpop.permute.xlu0 %628
    %v630 = vsel %vm48, %v629, 0
    %632 = vmatprep.subr.mxu0 0.0
    %633 = vmatpush1.msra.mxu0 0.0
    %634 = vmatprep.subr.mxu0 0.0
    %635 = vmatpush1.msra.mxu0 0.0
    %636 = vmatprep.subr.mxu0 0.0
    %637 = vmatpush1.msra.mxu0 0.0
    %638 = vmatprep.subr.mxu0 0.0
    %639 = vmatpush1.msra.mxu0 0.0
    %640 = vmatprep.subr.mxu0 0.0
    %641 = vmatpush1.msra.mxu0 0.0
    %642 = vmatprep.subr.mxu0 0.0
    %643 = vmatpush1.msra.mxu0 0.0
    %644 = vmatprep.subr.mxu0 0.0
    %645 = vmatpush1.msra.mxu0 0.0
    %646 = vmatprep.subr.mxu0 0.0
    %647 = vmatpush1.msra.mxu0 0.0
    %648 = vmatprep.subr.mxu0 0.0
    %649 = vmatpush1.msra.mxu0 0.0
    %650 = vmatprep.subr.mxu0 0.0
    %651 = vmatpush1.msra.mxu0 0.0
    %652 = vmatprep.subr.mxu0 0.0
    %653 = vmatpush1.msra.mxu0 0.0
    %654 = vmatprep.subr.mxu0 0.0
    %655 = vmatpush1.msra.mxu0 0.0
    %656 = vmatprep.subr.mxu0 0.0
    %657 = vmatpush1.msra.mxu0 0.0
    %658 = vmatprep.subr.mxu0 0.0
    %659 = vmatpush1.msra.mxu0 0.0
    %660 = vmatprep.subr.mxu0 0.0
    %661 = vmatpush1.msra.mxu0 0.0
    %662 = vmatprep.subr.mxu0 0.0
    %663 = vmatpush1.msra.mxu0 %v54
    %664 = vmatprep.subr.mxu0 0.0
    %665 = vmatpush2.msra.mxu0 0.0
    %666 = vmatprep.subr.mxu0 0.0
    %667 = vmatpush2.msra.mxu0 0.0
    %668 = vmatprep.subr.mxu0 0.0
    %669 = vmatpush2.msra.mxu0 0.0
    %670 = vmatprep.subr.mxu0 0.0
    %671 = vmatpush2.msra.mxu0 0.0
    %672 = vmatprep.subr.mxu0 0.0
    %673 = vmatpush2.msra.mxu0 0.0
    %674 = vmatprep.subr.mxu0 0.0
    %675 = vmatpush2.msra.mxu0 0.0
    %676 = vmatprep.subr.mxu0 0.0
    %677 = vmatpush2.msra.mxu0 0.0
    %678 = vmatprep.subr.mxu0 0.0
    %679 = vmatpush2.msra.mxu0 0.0
    %680 = vmatprep.subr.mxu0 0.0
    %681 = vmatpush2.msra.mxu0 0.0
    %682 = vmatprep.subr.mxu0 0.0
    %683 = vmatpush2.msra.mxu0 0.0
    %684 = vmatprep.subr.mxu0 0.0
    %685 = vmatpush2.msra.mxu0 0.0
    %686 = vmatprep.subr.mxu0 0.0
    %687 = vmatpush2.msra.mxu0 0.0
    %688 = vmatprep.subr.mxu0 0.0
    %689 = vmatpush2.msra.mxu0 0.0
    %690 = vmatprep.subr.mxu0 0.0
    %691 = vmatpush2.msra.mxu0 0.0
    %692 = vmatprep.subr.mxu0 0.0
    %693 = vmatpush2.msra.mxu0 0.0
    %694 = vmatprep.subr.mxu0 0.0
    %695 = vmatpush2.msra.mxu0 0.0
    %696 = vmatprep.mubr.f32.mxu0 0.0
    %697 = vmatmul.mubr.f32.gmra.mxu0 %v630
    %v698 = vpop.f32.mrf.mxu0
    %v699 = vadd.f32 %v46, %v698
    %v700 = vpop.f32.mrf.mxu0
    %701 = vdwg.mxu0
    %v702 = vmax.f32 %v699, 0.0
    %704 = vrot.lane.b32.xlu0 %v702, 96
    %v705 = vpop.permute.xlu0 %704
    %707 = vst.msk [vmem:[#allocation7 + $0x8] sm:$0xff] %vm378, %v705
    %v708 = vmax.f32 %v625, %v702
    %710 = vrot.lane.b32.xlu0 %v708, 16
    %v711 = vpop.permute.xlu0 %710
    %vm713 = vcmask 261248
    %714 = vst.msk [vmem:[#allocation7] sm:$0xff] %vm713, %v711
    %715 = vrot.lane.b32.xlu0 %v708, 48
    %v716 = vpop.permute.xlu0 %715
    %vm718 = vcmask 523648
    %719 = vst.msk [vmem:[#allocation7] sm:$0xff] %vm718, %v716
    %720 = vrot.lane.b32.xlu0 %v708, 80
    %v721 = vpop.permute.xlu0 %720
    %vm723 = vcmask 786048
    %724 = vst.msk [vmem:[#allocation7] sm:$0xff] %vm723, %v721
    %725 = vrot.lane.b32.xlu0 %v708, 112
    %v726 = vpop.permute.xlu0 %725
    %vm728 = vcmask 1048448
    %729 = vst.msk [vmem:[#allocation7] sm:$0xff] %vm728, %v726
    %730 = vst.msk [vmem:[#allocation7 + $0x8] sm:$0xff] %vm713, %v711
    %731 = vst.msk [vmem:[#allocation7 + $0x8] sm:$0xff] %vm718, %v716
    %732 = vst.msk [vmem:[#allocation7 + $0x8] sm:$0xff] %vm723, %v721
    %733 = vst.msk [vmem:[#allocation7 + $0x8] sm:$0xff] %vm728, %v726
    // Predicated region
    $region22: #{tpu_custom_call.1} parent=1 // pred_check
      _
    $region23: #{tpu_custom_call.1} parent=1 // pred_check_branch
      %735 = sbr.rel (0) target = $region25
    $region24: #{tpu_custom_call.1} parent=1 // pred_region
      %s737 = ssub.s32 256, 256
      %738 = vsyncadd [#allocation4], %s737
      %s740 = sshll.u32 [#allocation7], 4
      %s741 = int_to_ptr.vmem [resolvable:$true] %s740
      %743 = dma.vmem_to_hbm [thread:$0]  %s741, 256, %s3, [#allocation4]
    $region25: #{tpu_custom_call.1} parent=1 // pred_fallthru
      _
    // Predicated region
    $region26: #{tpu_custom_call.1} parent=1 // pred_check
      _
    $region27: #{tpu_custom_call.1} parent=1 // pred_check_branch
      %745 = sbr.rel (0) target = $region29
    $region28: #{tpu_custom_call.1} parent=1 // pred_region
      %746 = dma.done [#allocation4], 256
    $region29: #{tpu_custom_call.1} parent=1 // pred_fallthru
      _
    %747 = vsyncpa [#allocation3], 1
    %748 = vsyncpa [#allocation6], 1
    %749 = vsyncpa [#allocation4], 1

</llo_original>
